<compile_context>
chip_gen: v6e
topology: v6e:2x2x1
jax: 0.10.0
libtpu: 0.0.40
codegen_flags: <defaults>
</compile_context>

<pallas_src>
import functools

import jax
import jax.numpy as jnp
from jax.experimental import pallas as pl
from jax.experimental.pallas import tpu as pltpu

# Deterministic window weights / biases from Window_Conv2D.init_weight()
WINDOW_W = (50.0, 31.25, 45.455, 1.464, 11.628)
WINDOW_B = (-12.5, -7.687, -11.682, -0.081, -2.465)

LANE = 128  # vreg lane width


def window_conv_kernel(x_ref, o_ref, *, weights, biases, mode):
    # x_ref: (1, TR, 128)      -- one batch element's spatial tile, lane-dense
    # o_ref: (1, C, TR, 128)   -- per-channel output tiles
    x = x_ref[...]  # (1, TR, 128) f32
    for c, (w, b) in enumerate(zip(weights, biases)):
        y = x * w + b
        if mode == "relu":
            # upbound_relu: min(max(y, 0), 1)
            y = jnp.minimum(jnp.maximum(y, 0.0), 1.0)
        elif mode == "sigmoid":
            # upbound_sigmoid: 1.0 * sigmoid(y) == 0.5*tanh(0.5*y) + 0.5
            # (tanh form halves EUP work vs exp + divide)
            y = 0.5 * jnp.tanh(0.5 * y) + 0.5
        else:
            raise ValueError(mode)
        o_ref[:, c, :, :] = y.astype(o_ref.dtype)


def _round_up(v, m):
    return ((v + m - 1) // m) * m


def _select_tile_rows(rows, max_tile_rows):
    """Pick a sublane tile (multiple of 8) up to max_tile_rows, minimizing
    padding waste while keeping the tile large."""
    max_tile_rows = max(8, (max_tile_rows // 8) * 8)
    rows8 = _round_up(rows, 8)
    if rows8 <= max_tile_rows:
        return rows8
    # Search [max/2, max] (multiples of 8) for the candidate with the least
    # padding; ties go to the larger tile.
    best_tr, best_pad = max_tile_rows, (-rows8) % max_tile_rows
    lo = max(8, max_tile_rows // 2)
    for cand in range(max_tile_rows, lo - 1, -8):
        pad = (-rows8) % cand
        if pad < best_pad:
            best_tr, best_pad = cand, pad
            if pad == 0:
                break
    return best_tr


def window_conv2d(x_nchw, weights=WINDOW_W, biases=WINDOW_B, mode="relu",
                  max_tile_rows=512, out_dtype=jnp.float32):
    """Pallas equivalent of Window_Conv2D.forward.

    x_nchw: (N, 1, H, W) float32
    returns (N, C, H, W) `out_dtype` (default float32, matching the module)
    """
    N, c_in, H, W = x_nchw.shape
    assert c_in == 1, "Window_Conv2D uses in_channels=1"
    C = len(weights)
    S = H * W

    # ---- spatial packing: pad S up to a (tile_rows, 128) multiple -----------
    rows = pl.cdiv(S, LANE)
    tile_rows = _select_tile_rows(rows, max_tile_rows)
    padded_rows = _round_up(max(rows, tile_rows), tile_rows)
    S_pad = padded_rows * LANE
    grid_steps = padded_rows // tile_rows

    x_flat = x_nchw.reshape(N, S).astype(jnp.float32)
    if S_pad != S:
        x_flat = jnp.pad(x_flat, ((0, 0), (0, S_pad - S)))
    x3 = x_flat.reshape(N, padded_rows, LANE)

    out = pl.pallas_call(
        functools.partial(
            window_conv_kernel,
            weights=tuple(float(w) for w in weights),
            biases=tuple(float(b) for b in biases),
            mode=mode,
        ),
        out_shape=jax.ShapeDtypeStruct((N, C, padded_rows, LANE), out_dtype),
        grid_spec=pltpu.PrefetchScalarGridSpec(
            num_scalar_prefetch=0,
            grid=(N, grid_steps),
            in_specs=[
                pl.BlockSpec((1, tile_rows, LANE), lambda n, s: (n, s, 0)),
            ],
            out_specs=pl.BlockSpec((1, C, tile_rows, LANE),
                                   lambda n, s: (n, 0, s, 0)),
        ),
        compiler_params=pltpu.CompilerParams(
            dimension_semantics=("parallel", "parallel"),
            vmem_limit_bytes=32 * 1024 * 1024,
        ),
    )(x3)

    out = out.reshape(N, C, S_pad)[:, :, :S].reshape(N, C, H, W)
    return out


def _reference(x_nchw, weights, biases, mode):
    w = jnp.asarray(weights, dtype=jnp.float32)
    b = jnp.asarray(biases, dtype=jnp.float32)
    y = x_nchw.astype(jnp.float32) * w[None, :, None, None] + b[None, :, None, None]
    if mode == "relu":
        return jnp.minimum(jnp.maximum(y, 0.0), 1.0)
    return jax.nn.sigmoid(y)


if __name__ == "__main__":
    key = jax.random.PRNGKey(0)
    ok = True

    # Small NCHW input consistent with the module: batch=2, in_channels=1, 16x16
    x = jax.random.uniform(key, (2, 1, 16, 16), dtype=jnp.float32)
    for mode in ("relu", "sigmoid"):
        out = jax.block_until_ready(window_conv2d(x, WINDOW_W, WINDOW_B, mode=mode))
        ref = _reference(x, WINDOW_W, WINDOW_B, mode)
        if out.shape != (2, 5, 16, 16):
            ok = False
        if not jnp.allclose(out, ref, atol=1e-5, rtol=1e-5):
            ok = False

    # Odd spatial size (H*W not a multiple of 128) exercises the padding path.
    x_odd = jax.random.uniform(jax.random.PRNGKey(1), (1, 1, 17, 19),
                               dtype=jnp.float32)
    out_odd = jax.block_until_ready(window_conv2d(x_odd, mode="relu"))
    ref_odd = _reference(x_odd, WINDOW_W, WINDOW_B, "relu")
    if out_odd.shape != (1, 5, 17, 19):
        ok = False
    if not jnp.allclose(out_odd, ref_odd, atol=1e-5, rtol=1e-5):
        ok = False

    if ok:
        print("KERNEL_OK")
</pallas_src>

<mosaic_0001>
module attributes {stable_mosaic.version = 11 : i64} {
  func.func @window_conv_kernel(%arg0: i32, %arg1: i32, %arg2: memref<1x8x128xf32, #tpu.memory_space<vmem>>, %arg3: memref<1x5x8x128xf32, #tpu.memory_space<vmem>>) attributes {dimension_semantics = [#tpu.dimension_semantics<parallel>, #tpu.dimension_semantics<parallel>], iteration_bounds = array<i64: 2, 1>, scalar_prefetch = 0 : i64, scratch_operands = 0 : i64, tpu.core_type = #tpu.core_type<tc>, window_params = [{transform_indices = @transform_0, window_bounds = array<i64: 1, 8, 128>}, {transform_indices = @transform_1, window_bounds = array<i64: 1, 5, 8, 128>}]} {
    %c0 = arith.constant 0 : index
    %c0_0 = arith.constant 0 : index
    %c0_1 = arith.constant 0 : index
    %0 = vector.load %arg2[%c0, %c0_0, %c0_1] : memref<1x8x128xf32, #tpu.memory_space<vmem>>, vector<1x8x128xf32>
    %cst = arith.constant 5.000000e+01 : f32
    %1 = vector.broadcast %cst : f32 to vector<1x8x128xf32>
    %2 = arith.mulf %0, %1 : vector<1x8x128xf32>
    %cst_2 = arith.constant -1.250000e+01 : f32
    %3 = vector.broadcast %cst_2 : f32 to vector<1x8x128xf32>
    %4 = arith.addf %2, %3 : vector<1x8x128xf32>
    %cst_3 = arith.constant 0.000000e+00 : f32
    %5 = vector.broadcast %cst_3 : f32 to vector<1x8x128xf32>
    %6 = arith.maximumf %4, %5 : vector<1x8x128xf32>
    %cst_4 = arith.constant 1.000000e+00 : f32
    %7 = vector.broadcast %cst_4 : f32 to vector<1x8x128xf32>
    %8 = arith.minimumf %6, %7 : vector<1x8x128xf32>
    %c0_5 = arith.constant 0 : index
    %c0_6 = arith.constant 0 : index
    %c0_7 = arith.constant 0 : index
    %c0_8 = arith.constant 0 : index
    %9 = vector.load %arg3[%c0_5, %c0_6, %c0_7, %c0_8] : memref<1x5x8x128xf32, #tpu.memory_space<vmem>>, vector<1x1x8x128xf32>
    %10 = vector.shape_cast %9 : vector<1x1x8x128xf32> to vector<1x8x128xf32>
    %11 = vector.shape_cast %8 : vector<1x8x128xf32> to vector<1x1x8x128xf32>
    tpu.vector_store %arg3[%c0_5, %c0_6, %c0_7, %c0_8], %11 {strides = array<i32>} : memref<1x5x8x128xf32, #tpu.memory_space<vmem>>, vector<1x1x8x128xf32>,
    %cst_9 = arith.constant 3.125000e+01 : f32
    %12 = vector.broadcast %cst_9 : f32 to vector<1x8x128xf32>
    %13 = arith.mulf %0, %12 : vector<1x8x128xf32>
    %cst_10 = arith.constant -7.687000e+00 : f32
    %14 = vector.broadcast %cst_10 : f32 to vector<1x8x128xf32>
    %15 = arith.addf %13, %14 : vector<1x8x128xf32>
    %cst_11 = arith.constant 0.000000e+00 : f32
    %16 = vector.broadcast %cst_11 : f32 to vector<1x8x128xf32>
    %17 = arith.maximumf %15, %16 : vector<1x8x128xf32>
    %cst_12 = arith.constant 1.000000e+00 : f32
    %18 = vector.broadcast %cst_12 : f32 to vector<1x8x128xf32>
    %19 = arith.minimumf %17, %18 : vector<1x8x128xf32>
    %c0_13 = arith.constant 0 : index
    %c1 = arith.constant 1 : index
    %c0_14 = arith.constant 0 : index
    %c0_15 = arith.constant 0 : index
    %20 = vector.load %arg3[%c0_13, %c1, %c0_14, %c0_15] : memref<1x5x8x128xf32, #tpu.memory_space<vmem>>, vector<1x1x8x128xf32>
    %21 = vector.shape_cast %20 : vector<1x1x8x128xf32> to vector<1x8x128xf32>
    %22 = vector.shape_cast %19 : vector<1x8x128xf32> to vector<1x1x8x128xf32>
    tpu.vector_store %arg3[%c0_13, %c1, %c0_14, %c0_15], %22 {strides = array<i32>} : memref<1x5x8x128xf32, #tpu.memory_space<vmem>>, vector<1x1x8x128xf32>,
    %cst_16 = arith.constant 4.545500e+01 : f32
    %23 = vector.broadcast %cst_16 : f32 to vector<1x8x128xf32>
    %24 = arith.mulf %0, %23 : vector<1x8x128xf32>
    %cst_17 = arith.constant -1.168200e+01 : f32
    %25 = vector.broadcast %cst_17 : f32 to vector<1x8x128xf32>
    %26 = arith.addf %24, %25 : vector<1x8x128xf32>
    %cst_18 = arith.constant 0.000000e+00 : f32
    %27 = vector.broadcast %cst_18 : f32 to vector<1x8x128xf32>
    %28 = arith.maximumf %26, %27 : vector<1x8x128xf32>
    %cst_19 = arith.constant 1.000000e+00 : f32
    %29 = vector.broadcast %cst_19 : f32 to vector<1x8x128xf32>
    %30 = arith.minimumf %28, %29 : vector<1x8x128xf32>
    %c0_20 = arith.constant 0 : index
    %c2 = arith.constant 2 : index
    %c0_21 = arith.constant 0 : index
    %c0_22 = arith.constant 0 : index
    %31 = vector.load %arg3[%c0_20, %c2, %c0_21, %c0_22] : memref<1x5x8x128xf32, #tpu.memory_space<vmem>>, vector<1x1x8x128xf32>
    %32 = vector.shape_cast %31 : vector<1x1x8x128xf32> to vector<1x8x128xf32>
    %33 = vector.shape_cast %30 : vector<1x8x128xf32> to vector<1x1x8x128xf32>
    tpu.vector_store %arg3[%c0_20, %c2, %c0_21, %c0_22], %33 {strides = array<i32>} : memref<1x5x8x128xf32, #tpu.memory_space<vmem>>, vector<1x1x8x128xf32>,
    %cst_23 = arith.constant 1.464000e+00 : f32
    %34 = vector.broadcast %cst_23 : f32 to vector<1x8x128xf32>
    %35 = arith.mulf %0, %34 : vector<1x8x128xf32>
    %cst_24 = arith.constant -8.100000e-02 : f32
    %36 = vector.broadcast %cst_24 : f32 to vector<1x8x128xf32>
    %37 = arith.addf %35, %36 : vector<1x8x128xf32>
    %cst_25 = arith.constant 0.000000e+00 : f32
    %38 = vector.broadcast %cst_25 : f32 to vector<1x8x128xf32>
    %39 = arith.maximumf %37, %38 : vector<1x8x128xf32>
    %cst_26 = arith.constant 1.000000e+00 : f32
    %40 = vector.broadcast %cst_26 : f32 to vector<1x8x128xf32>
    %41 = arith.minimumf %39, %40 : vector<1x8x128xf32>
    %c0_27 = arith.constant 0 : index
    %c3 = arith.constant 3 : index
    %c0_28 = arith.constant 0 : index
    %c0_29 = arith.constant 0 : index
    %42 = vector.load %arg3[%c0_27, %c3, %c0_28, %c0_29] : memref<1x5x8x128xf32, #tpu.memory_space<vmem>>, vector<1x1x8x128xf32>
    %43 = vector.shape_cast %42 : vector<1x1x8x128xf32> to vector<1x8x128xf32>
    %44 = vector.shape_cast %41 : vector<1x8x128xf32> to vector<1x1x8x128xf32>
    tpu.vector_store %arg3[%c0_27, %c3, %c0_28, %c0_29], %44 {strides = array<i32>} : memref<1x5x8x128xf32, #tpu.memory_space<vmem>>, vector<1x1x8x128xf32>,
    %cst_30 = arith.constant 1.162800e+01 : f32
    %45 = vector.broadcast %cst_30 : f32 to vector<1x8x128xf32>
    %46 = arith.mulf %0, %45 : vector<1x8x128xf32>
    %cst_31 = arith.constant -2.465000e+00 : f32
    %47 = vector.broadcast %cst_31 : f32 to vector<1x8x128xf32>
    %48 = arith.addf %46, %47 : vector<1x8x128xf32>
    %cst_32 = arith.constant 0.000000e+00 : f32
    %49 = vector.broadcast %cst_32 : f32 to vector<1x8x128xf32>
    %50 = arith.maximumf %48, %49 : vector<1x8x128xf32>
    %cst_33 = arith.constant 1.000000e+00 : f32
    %51 = vector.broadcast %cst_33 : f32 to vector<1x8x128xf32>
    %52 = arith.minimumf %50, %51 : vector<1x8x128xf32>
    %c0_34 = arith.constant 0 : index
    %c4 = arith.constant 4 : index
    %c0_35 = arith.constant 0 : index
    %c0_36 = arith.constant 0 : index
    %53 = vector.load %arg3[%c0_34, %c4, %c0_35, %c0_36] : memref<1x5x8x128xf32, #tpu.memory_space<vmem>>, vector<1x1x8x128xf32>
    %54 = vector.shape_cast %53 : vector<1x1x8x128xf32> to vector<1x8x128xf32>
    %55 = vector.shape_cast %52 : vector<1x8x128xf32> to vector<1x1x8x128xf32>
    tpu.vector_store %arg3[%c0_34, %c4, %c0_35, %c0_36], %55 {strides = array<i32>} : memref<1x5x8x128xf32, #tpu.memory_space<vmem>>, vector<1x1x8x128xf32>,
    return
  }
  func.func @transform_0(%arg0: i32, %arg1: i32) -> (i32, i32, i32) {
    %c0_i32 = arith.constant 0 : i32
    %c0_i32_0 = arith.constant 0 : i32
    return %arg0, %arg1, %c0_i32 : i32, i32, i32
  }
  func.func @transform_1(%arg0: i32, %arg1: i32) -> (i32, i32, i32, i32) {
    %c0_i32 = arith.constant 0 : i32
    %c0_i32_0 = arith.constant 0 : i32
    %c0_i32_1 = arith.constant 0 : i32
    return %arg0, %c0_i32, %arg1, %c0_i32_0 : i32, i32, i32, i32
  }
}

</mosaic_0001>

<llo_original>
// kernel: tpu_custom_call.1
$region0: #{tpu_custom_call.1}
  #allocation0 [shape = 'u32[]', space=smem, size = 0x4, offset = 0x4, fixed_abs, tag = 'smem constant byte address 0x4 - core index']
  #allocation1 [shape = 'u32[144,128]{1,0:T(1,128)}', space=vmem, size = 0x12000, scoped, tag = 'internal scratch']
  %s0 = inlined_call_operand.hbm [shape: f32[2,8,128], index: 0, kind: input, shape index: {}]
  %s1 = inlined_call_operand.hbm [shape: f32[2,5,8,128], index: 1, kind: output, shape index: {}]
  %s2 = sld [smem:[#allocation0]]
  $region41: #{tpu_custom_call.1} parent=0
    _
  %s4 = ssub.s32 1, %s2
  %s5 = scalar_select 0, %s4, %s2
  $region1: #{tpu_custom_call.1} parent=0
    #allocation2 [shape = 'u8[8192]{0}', space=vmem, size = 0x2000, scoped, tag = 'input window, operand 0']
    #allocation3 [shape = 's32[2]{0}', space=sflag, size = 0x8, scoped, tag = 'scoped memory for tpu_custom_call.1']
    #allocation4 [shape = 's32[2]{0}', space=sflag, size = 0x8, scoped, tag = 'scoped memory for tpu_custom_call.1']
    #allocation5 [shape = 'u8[40960]{0}', space=vmem, size = 0xa000, scoped, tag = 'output window, operand 0']
    %6 = vsyncpa [#allocation3], 0
    %s7 = scalar_lea.sflag [#allocation3], 1
    %8 = vsyncpa %s7, 0
    %9 = vsyncpa [#allocation4], 0
    %s10 = scalar_lea.sflag [#allocation4], 1
    %11 = vsyncpa %s10, 0
    loop: start=0, step=1, limit=4
    $region2: #{tpu_custom_call.1} parent=1 // loop_pre_header
      _
    $region3: #{tpu_custom_call.1} parent=1 // loop_header
      %s13 = sphi 0, %s17
      %p14 = scmp.ge.s32.totalorder %s13, 4
      %s20 = sphi 0, %s32
      %s21 = sphi 0, %s28
      %s22 = sphi 0, %s20
      %s23 = sphi 0, %s21
      %s24 = sphi 0, %s22
      %s25 = sphi 0, %s23
      %s37 = sphi 0, %s39
      %s40 = sphi 0, %s37
      %s41 = sphi 0, %s40
      %s57 = sphi 0, %s41
      %s65 = sphi 0, %s67
      %s68 = sphi 0, %s65
      %s69 = sphi 0, %s68
      %s85 = sphi 0, %s69
    $region4: #{tpu_custom_call.1} parent=1 // loop_header_branch
      %16 = sbr.rel (%p14) target = $region8
    $region5: #{tpu_custom_call.1} parent=1 // loop_body
      %s18 = ssub.s32 %s13, 1
      %s19 = ssub.s32 %s13, 2
      %s26 = sadd.s32 1, %s21
      %p27 = scmp.ge.s32.totalorder %s26, 1
      %s28 = scalar_select %p27, 0, %s26
      %s29 = sadd.s32 1, %s20
      %s30 = scalar_select %p27, %s29, %s20
      %p31 = scmp.ge.s32.totalorder %s30, 2
      %s32 = scalar_select %p31, 0, %s30
      %s33 = ssub.s32 %s20, %s32
      %s34 = ssub.s32 %s21, %s28
      %s35 = sor.u32 %s33, %s34
      %p36 = scmp.eq.s32.totalorder %s35, 0
      %s38 = sadd.s32 %s37, 1
      %s39 = scalar_select %p36, %s37, %s38
      %p42 = pneg %p36
      %p43 = scmp.eq.s32.totalorder %s13, 1
      %p44 = por %p42, %p43
      %p45 = scmp.ne.s32.totalorder %s37, %s40
      %p46 = scmp.eq.s32.totalorder %s13, 0
      %p47 = por %p45, %p46
      %p48 = scmp.ne.s32.totalorder %s37, %s40
      %p49 = scmp.eq.s32.totalorder %s18, 1
      %p50 = por %p48, %p49
      %p51 = scmp.ne.s32.totalorder %s40, %s41
      %p52 = scmp.eq.s32.totalorder %s18, 0
      %p53 = por %p51, %p52
      %p54 = scmp.ne.s32.totalorder %s40, %s41
      %p55 = scmp.eq.s32.totalorder %s19, 1
      %p56 = por %p54, %p55
      %p58 = scmp.ne.s32.totalorder %s41, %s57
      %p59 = scmp.eq.s32.totalorder %s19, 0
      %p60 = por %p58, %p59
      %s61 = ssub.s32 %s20, %s32
      %s62 = ssub.s32 %s21, %s28
      %s63 = sor.u32 %s61, %s62
      %p64 = scmp.eq.s32.totalorder %s63, 0
      %s66 = sadd.s32 %s65, 1
      %s67 = scalar_select %p64, %s65, %s66
      %p70 = pneg %p64
      %p71 = scmp.eq.s32.totalorder %s13, 1
      %p72 = por %p70, %p71
      %p73 = scmp.ne.s32.totalorder %s65, %s68
      %p74 = scmp.eq.s32.totalorder %s13, 0
      %p75 = por %p73, %p74
      %p76 = scmp.ne.s32.totalorder %s65, %s68
      %p77 = scmp.eq.s32.totalorder %s18, 1
      %p78 = por %p76, %p77
      %p79 = scmp.ne.s32.totalorder %s68, %s69
      %p80 = scmp.eq.s32.totalorder %s18, 0
      %p81 = por %p79, %p80
      %p82 = scmp.ne.s32.totalorder %s68, %s69
      %p83 = scmp.eq.s32.totalorder %s19, 1
      %p84 = por %p82, %p83
      %p86 = scmp.ne.s32.totalorder %s69, %s85
      %p87 = scmp.eq.s32.totalorder %s19, 0
      %p88 = por %p86, %p87
      %p89 = scmp.le.s32.totalorder 1, %s13
      %p90 = scmp.lt.s32.totalorder %s13, 3
      %p91 = pnand %p89, %p90
      %p92 = pneg %p91
      // Predicated region
      $region9: #{tpu_custom_call.1} parent=5 // pred_check
        _
      $region10: #{tpu_custom_call.1} parent=5 // pred_check_branch
        %94 = sbr.rel (%p91) target = $region12
      $region11: #{tpu_custom_call.1} parent=5 // pred_region
        %s95 = ssub.s32 %s13, 1
      $region12: #{tpu_custom_call.1} parent=5 // pred_fallthru
        _
      %p96 = scmp.lt.s32.totalorder %s13, 2
      // Predicated region
      $region13: #{tpu_custom_call.1} parent=5 // pred_check
        %p97 = pneg %p96
      $region14: #{tpu_custom_call.1} parent=5 // pred_check_branch
        %99 = sbr.rel (%p97) target = $region16
      $region15: #{tpu_custom_call.1} parent=5 // pred_region
        // Predicated region
        $region17: #{tpu_custom_call.1} parent=15 // pred_check
          %p100 = pneg %p47
        $region18: #{tpu_custom_call.1} parent=15 // pred_check_branch
          %102 = sbr.rel (%p100) target = $region20
        $region19: #{tpu_custom_call.1} parent=15 // pred_region
          %s103 = sand.u32 %s37, 1
          %s104 = scalar_lea.sflag [#allocation3], %s103
          %s105 = sand.u32 %s37, 1
          %s106 = smul.addr %s105, 8
          %s107 = scalar_lea.vmem [#allocation2], %s106
          %s109 = ssub.s32 128, 128
          %110 = vsyncadd %s104, %s109
          %s111 = sadd.s32 %s21, %s20
          %s112 = smul.addr %s111, 128
          %s113 = scalar_lea.hbm %s0, %s112
          %s115 = sshll.u32 %s107, 4
          %s116 = int_to_ptr.vmem [resolvable:$true] %s115
          %118 = dma.hbm_to_vmem [thread:$0]  %s113, 128, %s116, %s104
        $region20: #{tpu_custom_call.1} parent=15 // pred_fallthru
          _
      $region16: #{tpu_custom_call.1} parent=5 // pred_fallthru
        _
      %p119 = scmp.le.s32.totalorder 1, %s13
      %p120 = scmp.lt.s32.totalorder %s13, 3
      %p121 = pnand %p119, %p120
      %p122 = pneg %p121
      // Predicated region
      $region21: #{tpu_custom_call.1} parent=5 // pred_check
        _
      $region22: #{tpu_custom_call.1} parent=5 // pred_check_branch
        %124 = sbr.rel (%p121) target = $region24
      $region23: #{tpu_custom_call.1} parent=5 // pred_region
        %s125 = ssub.s32 %s13, 1
        %s126 = sand.u32 %s40, 1
        %s127 = scalar_lea.sflag [#allocation3], %s126
        %s128 = sand.u32 %s40, 1
        %s129 = smul.addr %s128, 8
        %s130 = scalar_lea.vmem [#allocation2], %s129
        // Predicated region
        $region25: #{tpu_custom_call.1} parent=23 // pred_check
          %p131 = pneg %p53
        $region26: #{tpu_custom_call.1} parent=23 // pred_check_branch
          %133 = sbr.rel (%p131) target = $region28
        $region27: #{tpu_custom_call.1} parent=23 // pred_region
          %134 = dma.done %s127, 128
        $region28: #{tpu_custom_call.1} parent=23 // pred_fallthru
          _
        %s135 = sand.u32 %s40, 1
        %s136 = scalar_lea.sflag [#allocation3], %s135
        %s137 = sand.u32 %s40, 1
        %s138 = smul.addr %s137, 8
        %s139 = scalar_lea.vmem [#allocation2], %s138
        %p140 = pneg %p53
        %p141 = pneg %p50
        %p142 = pneg %p81
        %p143 = pneg %p78
        %s144 = sand.u32 %s68, 1
        %s145 = scalar_lea.sflag [#allocation4], %s144
        %s146 = sand.u32 %s68, 1
        %s147 = smul.addr %s146, 40
        %s148 = scalar_lea.vmem [#allocation5], %s147
        %v149 = vld [vmem:[%s130] sm:$0xff]
        %v150 = vmul.f32 %v149, 50.0
        %v151 = vadd.f32 %v150, -12.5
        %v152 = vmax.f32 %v151, 0.0
        %v153 = vmin.f32 %v152, 1.0
        %154 = vst [vmem:[%s148] sm:$0xff] %v153
        %v155 = vmul.f32 %v149, 31.25
        %v156 = vadd.f32 %v155, -7.687
        %v157 = vmax.f32 %v156, 0.0
        %v158 = vmin.f32 %v157, 1.0
        %s159 = scalar_lea.vmem %s148, 8 [#allocation5]
        %160 = vst [vmem:[%s159] sm:$0xff] %v158
        %v161 = vmul.f32 %v149, 45.455
        %v162 = vadd.f32 %v161, -11.682
        %v163 = vmax.f32 %v162, 0.0
        %v164 = vmin.f32 %v163, 1.0
        %s165 = scalar_lea.vmem %s148, 16 [#allocation5]
        %166 = vst [vmem:[%s165] sm:$0xff] %v164
        %v167 = vmul.f32 %v149, 1.464
        %v168 = vadd.f32 %v167, -0.081
        %v169 = vmax.f32 %v168, 0.0
        %v170 = vmin.f32 %v169, 1.0
        %s171 = scalar_lea.vmem %s148, 24 [#allocation5]
        %172 = vst [vmem:[%s171] sm:$0xff] %v170
        %v173 = vmul.f32 %v149, 11.628
        %v174 = vadd.f32 %v173, -2.465
        %v175 = vmax.f32 %v174, 0.0
        %v176 = vmin.f32 %v175, 1.0
        %s177 = scalar_lea.vmem %s148, 32 [#allocation5]
        %178 = vst [vmem:[%s177] sm:$0xff] %v176
        %s179 = sand.u32 %s68, 1
        %s180 = scalar_lea.sflag [#allocation4], %s179
        %s181 = sand.u32 %s68, 1
        %s182 = smul.addr %s181, 40
        %s183 = scalar_lea.vmem [#allocation5], %s182
        // Predicated region
        $region29: #{tpu_custom_call.1} parent=23 // pred_check
          %p184 = pneg %p78
        $region30: #{tpu_custom_call.1} parent=23 // pred_check_branch
          %186 = sbr.rel (%p184) target = $region32
        $region31: #{tpu_custom_call.1} parent=23 // pred_region
          %s188 = ssub.s32 640, 640
          %189 = vsyncadd %s180, %s188
          %s190 = smul.addr %s22, 5
          %s191 = sadd.s32 %s23, %s190
          %s192 = smul.addr %s191, 128
          %s193 = scalar_lea.hbm %s1, %s192
          %s194 = sshll.u32 %s183, 4
          %s195 = int_to_ptr.vmem [resolvable:$true] %s194
          %200 = dma.vmem_to_hbm [thread:$0]  %s195, 640, %s193, %s180, 128, 128, 8
        $region32: #{tpu_custom_call.1} parent=23 // pred_fallthru
          _
      $region24: #{tpu_custom_call.1} parent=5 // pred_fallthru
        _
      %p201 = scmp.le.s32.totalorder 2, %s13
      // Predicated region
      $region33: #{tpu_custom_call.1} parent=5 // pred_check
        %p202 = pneg %p201
      $region34: #{tpu_custom_call.1} parent=5 // pred_check_branch
        %204 = sbr.rel (%p202) target = $region36
      $region35: #{tpu_custom_call.1} parent=5 // pred_region
        %s205 = ssub.s32 %s13, 2
        // Predicated region
        $region37: #{tpu_custom_call.1} parent=35 // pred_check
          %p206 = pneg %p84
        $region38: #{tpu_custom_call.1} parent=35 // pred_check_branch
          %208 = sbr.rel (%p206) target = $region40
        $region39: #{tpu_custom_call.1} parent=35 // pred_region
          %s209 = sand.u32 %s69, 1
          %s210 = scalar_lea.sflag [#allocation4], %s209
          %s211 = sand.u32 %s69, 1
          %s212 = smul.addr %s211, 40
          %s213 = scalar_lea.vmem [#allocation5], %s212
          %214 = dma.done %s210, 640
        $region40: #{tpu_custom_call.1} parent=35 // pred_fallthru
          _
      $region36: #{tpu_custom_call.1} parent=5 // pred_fallthru
        _
    $region6: #{tpu_custom_call.1} parent=1 // loop_footer
      %s17 = sadd.s32 1, %s13
    $region7: #{tpu_custom_call.1} parent=1 // loop_footer_branch
      %12 = sbr.rel target = $region3
    $region8: #{tpu_custom_call.1} parent=1 // loop_exit
      _
    %215 = vsyncpa [#allocation3], 1
    %s216 = scalar_lea.sflag [#allocation3], 1
    %217 = vsyncpa %s216, 1
    %218 = vsyncpa [#allocation4], 1
    %s219 = scalar_lea.sflag [#allocation4], 1
    %220 = vsyncpa %s219, 1

</llo_original>
